<compile_context>
chip_gen: v7x
topology: tpu7x:2x2x1
jax: 0.10.0
libtpu: 0.0.40
codegen_flags: <defaults>
</compile_context>

<pallas_src>
import functools

import jax
import jax.numpy as jnp
import numpy as np
from jax.experimental import pallas as pl
from jax.experimental.pallas import tpu as pltpu


# ----------------------------- glue: entmax 1.5 ------------------------------
def entmax15(z):
    """Forward of alpha=1.5 entmax along the last axis (tiny, parameter-only)."""
    z = z - jnp.max(z, axis=-1, keepdims=True)
    z = z / 2.0
    z_sorted = jnp.flip(jnp.sort(z, axis=-1), axis=-1)
    d = z.shape[-1]
    rho = jnp.arange(1, d + 1, dtype=z.dtype)
    mean = jnp.cumsum(z_sorted, axis=-1) / rho
    mean_sq = jnp.cumsum(z_sorted ** 2, axis=-1) / rho
    ss = rho * (mean_sq - mean ** 2)
    delta = (1.0 - ss) / rho
    delta_nz = jnp.clip(delta, 0.0, None)
    tau = mean - jnp.sqrt(delta_nz)
    support = jnp.sum((tau <= z_sorted).astype(jnp.int32), axis=-1, keepdims=True)
    tau_star = jnp.take_along_axis(tau, support - 1, axis=-1)
    return jnp.clip(z - tau_star, 0.0, None) ** 2


# ------------------------------- Pallas kernel --------------------------------
def _fast_sigmoid(z):
    # sigmoid(z) = 1 / (1 + exp(-z)); exp and the approximate reciprocal both
    # run on the EUP slot, keeping the VPU free for the GLU multiply.
    return pl.reciprocal(1.0 + jnp.exp(-z), approx=True)


def capsule_decoder_block_kernel(x_ref, wxa_ref, bxa_ref, w2h_ref, s_ref,
                                 out_ref, *, po1, po2):
    """Fused two-layer AbstractLayer block on one batch tile.

    wxa : (D, 2*P*(o1+o2)) bf16  fused x-side weight: [layer1 packed | layer2 x-rows]
    bxa : (1, 2*P*(o1+o2)) f32   merged biases in the same column order
    w2h : (P*o1, 2*P*o2)   bf16  layer-2 out1-rows, tiled so h1 @ w2h == out1 @ W2[D:]
    s   : (P*o2, o_store)  f32   0/1 per-path summing matrix (optionally lane-padded)
    """
    n1 = 2 * po1
    x = x_ref[...]                                                  # (TB, D) bf16

    # ---- single x-side MXU push covering both layers' x contributions ----
    yx = jnp.dot(x, wxa_ref[...], preferred_element_type=jnp.float32) + bxa_ref[...]

    # ---- layer 1 GLU over all packed paths: cols [0,P*o1) relu | [P*o1,2P*o1) sig
    h1 = jax.nn.relu(yx[:, :po1]) * _fast_sigmoid(yx[:, po1:n1])    # (TB, P*o1)

    # ---- layer 2: concat([x, out1]) replaced by the row-split / tiled weight ----
    y2 = yx[:, n1:] + jnp.dot(h1.astype(w2h_ref.dtype), w2h_ref[...],
                              preferred_element_type=jnp.float32)   # (TB, 2*P*o2)
    h2 = jax.nn.relu(y2[:, :po2]) * _fast_sigmoid(y2[:, po2:])      # (TB, P*o2)

    # ---- per-path sum (+ optional lane padding) via a 0/1 matrix -> dense store
    out_ref[...] = jnp.dot(h2, s_ref[...],
                           preferred_element_type=jnp.float32).astype(out_ref.dtype)


# --------------------------- one-time parameter packing ------------------------
def _pack_layer(m, w, b, s, t):
    """Fold entmax mask + eval-BN affine into the grouped-conv weight and pack paths.

    m: (P, D)  w: (P, D, 2O)  b, s, t: (P, 2O)
    Returns W_packed (D, 2*P*O) with columns [relu of all paths | sig of all
    paths] and b_packed (1, 2*P*O) in the same order.  Exact algebra in f32.
    """
    p, d, two_o = w.shape
    o = two_o // 2
    w_f = m[:, :, None] * w * s[:, None, :]                  # (P, D, 2O)
    b_f = b * s + t                                           # (P, 2O)
    w_relu = jnp.transpose(w_f[:, :, :o], (1, 0, 2)).reshape(d, p * o)
    w_sig = jnp.transpose(w_f[:, :, o:], (1, 0, 2)).reshape(d, p * o)
    w_packed = jnp.concatenate([w_relu, w_sig], axis=1)       # (D, 2*P*O)
    b_packed = jnp.concatenate([b_f[:, :o].reshape(p * o),
                                b_f[:, o:].reshape(p * o)]).reshape(1, 2 * p * o)
    return w_packed, b_packed


def pack_block_params(params, *, input_dim, n_path, base_outdim,
                      weight_dtype=jnp.bfloat16):
    """Precompute (once, outside the per-call path) all packed kernel operands."""
    o1 = base_outdim // 2
    o2 = base_outdim
    m1, w1, b1, s1, t1, m2, w2, b2, s2, t2 = params

    w1p, b1p = _pack_layer(m1, w1, b1, s1, t1)                # (D, 2*P*o1)
    w2p, b2p = _pack_layer(m2, w2, b2, s2, t2)                # (D+o1, 2*P*o2)

    # Fuse the two x-side matmuls (layer-1 + x-rows of layer-2) into one push.
    wxa = jnp.concatenate([w1p, w2p[:input_dim]], axis=1)     # (D, 2P(o1+o2))
    bxa = jnp.concatenate([b1p, b2p], axis=1)                 # (1, 2P(o1+o2))

    # out1-rows of layer-2, tiled so h1 @ w2h == out1 @ W2[D:] (path-sum fold).
    # Keep this tiling only while P*o1 stays under the MXU contraction depth
    # (128 on v5e); here P*o1 = 64, so it is free.
    w2h = jnp.tile(w2p[input_dim:], (n_path, 1))              # (P*o1, 2*P*o2)

    # Per-path summing matrices: plain (tb, o2 store) and 128-lane padded slab.
    o_pad = ((o2 + 127) // 128) * 128
    s_core = jnp.tile(jnp.eye(o2, dtype=jnp.float32), (n_path, 1))   # (P*o2, o2)
    s_padded = jnp.pad(s_core, ((0, 0), (0, o_pad - o2)))            # (P*o2, o_pad)

    return dict(
        wxa=jnp.asarray(wxa, weight_dtype),
        bxa=jnp.asarray(bxa, jnp.float32),
        w2h=jnp.asarray(w2h, weight_dtype),
        s_core=s_core,
        s_padded=s_padded,
        n_path=n_path, o1=o1, o2=o2, input_dim=input_dim,
        weight_dtype=weight_dtype,
    )


# ------------------------------ batch-tile policy ------------------------------
def _default_tile_rows(batch):
    # Latency-bound small batches: ONE grid step.  Never shrink the tile just
    # to manufacture extra steps -- the grid is a sequential loop on v5e/v6e
    # (1 TensorCore) and even on v7x the megacore win does not cover the extra
    # ~0.35us/step + halved MXU LHS rows at this size.
    if batch <= 512:
        return max(16, ((batch + 15) // 16) * 16)
    # Throughput regime: >=512-row tiles amortize per-step overhead; multiple
    # steps on the "parallel" batch axis let v7x's two TensorCores share work.
    # VMEM is ample on every generation (incl. v7x's 64 MiB) at tb=1024.
    return 1024 if batch >= 2048 else 512


# --------------------------------- call wrapper --------------------------------
def capsule_decoder_basic_block(x, packed, *, tb=None):
    B, D = x.shape
    assert D == packed["input_dim"], (D, packed["input_dim"])
    P, o1, o2 = packed["n_path"], packed["o1"], packed["o2"]

    if tb is None:
        tb = _default_tile_rows(B)
    tb = max(16, ((int(tb) + 15) // 16) * 16)     # bf16 sublane multiple
    grid_b = pl.cdiv(B, tb)
    b_pad = grid_b * tb

    # Output lane padding: keep the 128-lane dense store only in the small-B
    # latency regime; at large B the padded slab would 4x the HBM writeback, so
    # store (tb, o2) directly (legal: block last dim equals the full array dim).
    s_mat = packed["s_padded"] if B <= 512 else packed["s_core"]
    o_store = s_mat.shape[1]

    # bf16 activations halve HBM->VMEM bytes; matmul accumulation stays f32.
    xw = x.astype(packed["weight_dtype"])
    if b_pad != B:
        xw = jnp.pad(xw, ((0, b_pad - B), (0, 0)))

    wxa, bxa, w2h = packed["wxa"], packed["bxa"], packed["w2h"]

    def rep_spec(a):
        # Grid-invariant operand: constant index map, kept resident across steps.
        return pl.BlockSpec(a.shape, lambda i, _n=a.ndim: (0,) * _n)

    kernel = functools.partial(capsule_decoder_block_kernel,
                               po1=P * o1, po2=P * o2)

    out = pl.pallas_call(
        kernel,
        out_shape=jax.ShapeDtypeStruct((b_pad, o_store), jnp.float32),
        grid_spec=pltpu.PrefetchScalarGridSpec(
            num_scalar_prefetch=0,
            grid=(grid_b,),
            in_specs=[pl.BlockSpec((tb, D), lambda i: (i, 0))]
                     + [rep_spec(a) for a in (wxa, bxa, w2h, s_mat)],
            out_specs=pl.BlockSpec((tb, o_store), lambda i: (i, 0)),
        ),
        compiler_params=pltpu.CompilerParams(dimension_semantics=("parallel",)),
    )(xw, wxa, bxa, w2h, s_mat)

    return out[:B, :o2]


# --------------------------- deterministic parameters --------------------------
def init_abstract_layer_params(key, in_dim, out_dim, n_path, eps=1e-5):
    k_mask, k_w, k_b = jax.random.split(key, 3)
    # LearnableLocality weight ~ U[0,1), then entmax15 -> mask (n_path, in_dim)
    mask_w = jax.random.uniform(k_mask, (n_path, in_dim), jnp.float32)
    m = entmax15(mask_w)
    # Conv1d(in_dim*n_path -> 2*n_path*out_dim, groups=n_path, k=1) weight,
    # xavier-normal-style deterministic init.
    out_ch = 2 * n_path * out_dim
    gain = np.sqrt((in_dim * n_path + out_ch) / np.sqrt(in_dim * n_path))
    std = gain * np.sqrt(2.0 / (in_dim + out_ch))
    conv_w = std * jax.random.normal(k_w, (out_ch, in_dim), jnp.float32)
    bound = 1.0 / np.sqrt(in_dim)
    conv_b = jax.random.uniform(k_b, (out_ch,), jnp.float32, -bound, bound)
    # per-path weight (n_path, in_dim, 2*out_dim) and bias (n_path, 2*out_dim)
    w = jnp.transpose(conv_w.reshape(n_path, 2 * out_dim, in_dim), (0, 2, 1))
    b = conv_b.reshape(n_path, 2 * out_dim)
    # BatchNorm1d eval-mode: gamma=1, beta=0, running_mean=0, running_var=1
    gamma = jnp.ones((n_path, 2 * out_dim), jnp.float32)
    beta = jnp.zeros((n_path, 2 * out_dim), jnp.float32)
    running_mean = jnp.zeros_like(gamma)
    running_var = jnp.ones_like(gamma)
    s = gamma / jnp.sqrt(running_var + eps)
    t = beta - running_mean * s
    return m, w, b, s, t


# ------------------------------- pure-JAX reference ----------------------------
def reference(x, params, n_path, base_outdim):
    """Unfused f32 reference (per-path mask/conv/BN/GLU), matches the PyTorch block."""
    m1, w1, b1, s1, t1, m2, w2, b2, s2, t2 = params

    def layer(x, m, w, b, s, t, out_dim):
        acc = jnp.zeros((x.shape[0], out_dim), jnp.float32)
        for p in range(n_path):
            y = (x * m[p]) @ w[p] + b[p]
            y = y * s[p] + t[p]
            acc = acc + jax.nn.relu(y[:, :out_dim]) * jax.nn.sigmoid(y[:, out_dim:])
        return acc

    o1 = layer(x, m1, w1, b1, s1, t1, base_outdim // 2)
    x2 = jnp.concatenate([x, o1], axis=-1)
    return layer(x2, m2, w2, b2, s2, t2, base_outdim)


# ------------------------------------- main ------------------------------------
if __name__ == "__main__":
    batch = 16
    input_dim = 16
    base_outdim = 32
    n_path = 4

    key = jax.random.PRNGKey(0)
    kx, k1, k2 = jax.random.split(key, 3)

    x = jax.random.normal(kx, (batch, input_dim), jnp.float32)

    # conv1: AbstractLayer(input_dim, base_outdim // 2, n_path)
    p1 = init_abstract_layer_params(k1, input_dim, base_outdim // 2, n_path)
    # conv2: AbstractLayer(input_dim + base_outdim // 2, base_outdim, n_path)
    p2 = init_abstract_layer_params(k2, input_dim + base_outdim // 2, base_outdim, n_path)
    params = tuple(p1) + tuple(p2)

    # Pack / fold once (hoisted out of the per-call path).
    packed = pack_block_params(params, input_dim=input_dim, n_path=n_path,
                               base_outdim=base_outdim)

    out = capsule_decoder_basic_block(x, packed)
    out = jax.block_until_ready(out)

    ref = jax.block_until_ready(reference(x, params, n_path, base_outdim))
    assert out.shape == (batch, base_outdim), out.shape

    # bf16 activations/weights inside the kernel vs. the f32 unfused reference:
    # tolerance relaxed per review (bf16 quantization, ~0.2% per element).
    o_np, r_np = np.asarray(out), np.asarray(ref)
    if not np.allclose(o_np, r_np, atol=5e-2, rtol=5e-2):
        raise AssertionError(
            "Pallas kernel output does not match JAX reference; "
            f"max abs err = {np.max(np.abs(o_np - r_np)):.4e}")

    print("KERNEL_OK")
</pallas_src>

<mosaic_0001>
module attributes {stable_mosaic.version = 11 : i64} {
  func.func @capsule_decoder_block_kernel(%arg0: i32, %arg1: memref<16x16xbf16, #tpu.memory_space<vmem>>, %arg2: memref<16x384xbf16, #tpu.memory_space<vmem>>, %arg3: memref<1x384xf32, #tpu.memory_space<vmem>>, %arg4: memref<64x256xbf16, #tpu.memory_space<vmem>>, %arg5: memref<128x128xf32, #tpu.memory_space<vmem>>, %arg6: memref<16x128xf32, #tpu.memory_space<vmem>>) attributes {dimension_semantics = [#tpu.dimension_semantics<parallel>], iteration_bounds = array<i64: 1>, scalar_prefetch = 0 : i64, scratch_operands = 0 : i64, tpu.core_type = #tpu.core_type<tc>, window_params = [{transform_indices = @transform_0, window_bounds = array<i64: 16, 16>}, {pipeline_mode = #tpu.pipeline_mode<synchronous>, transform_indices = @transform_1, window_bounds = array<i64: 16, 384>}, {pipeline_mode = #tpu.pipeline_mode<synchronous>, transform_indices = @transform_2, window_bounds = array<i64: 1, 384>}, {pipeline_mode = #tpu.pipeline_mode<synchronous>, transform_indices = @transform_3, window_bounds = array<i64: 64, 256>}, {pipeline_mode = #tpu.pipeline_mode<synchronous>, transform_indices = @transform_4, window_bounds = array<i64: 128, 128>}, {transform_indices = @transform_5, window_bounds = array<i64: 16, 128>}]} {
    %c0 = arith.constant 0 : index
    %c0_0 = arith.constant 0 : index
    %0 = vector.load %arg1[%c0, %c0_0] : memref<16x16xbf16, #tpu.memory_space<vmem>>, vector<16x16xbf16>
    %c0_1 = arith.constant 0 : index
    %c0_2 = arith.constant 0 : index
    %1 = vector.load %arg2[%c0_1, %c0_2] : memref<16x384xbf16, #tpu.memory_space<vmem>>, vector<16x384xbf16>
    %cst = arith.constant dense<0.000000e+00> : vector<16x384xf32>
    %2 = tpu.matmul %0, %1, %cst {dimension_numbers = #tpu.dot_dimension_numbers<[1], [0], [0], [1], [0, 0, 1, 1], [], []>} : vector<16x16xbf16>, vector<16x384xbf16>, vector<16x384xf32> -> vector<16x384xf32>
    %c0_3 = arith.constant 0 : index
    %c0_4 = arith.constant 0 : index
    %3 = vector.load %arg3[%c0_3, %c0_4] : memref<1x384xf32, #tpu.memory_space<vmem>>, vector<1x384xf32>
    %4 = vector.broadcast %3 : vector<1x384xf32> to vector<16x384xf32>
    %5 = arith.addf %2, %4 : vector<16x384xf32>
    %6 = vector.extract_strided_slice %5 {offsets = [0, 0], sizes = [16, 64], strides = [1, 1]} : vector<16x384xf32> to vector<16x64xf32>
    %cst_5 = arith.constant 0.000000e+00 : f32
    %7 = vector.broadcast %cst_5 : f32 to vector<16x64xf32>
    %8 = arith.maximumf %6, %7 : vector<16x64xf32>
    %9 = vector.extract_strided_slice %5 {offsets = [0, 64], sizes = [16, 64], strides = [1, 1]} : vector<16x384xf32> to vector<16x64xf32>
    %cst_6 = arith.constant 0.000000e+00 : f32
    %10 = vector.broadcast %cst_6 : f32 to vector<16x64xf32>
    %11 = arith.subf %10, %9 : vector<16x64xf32>
    %12 = math.exp %11 : vector<16x64xf32>
    %cst_7 = arith.constant 1.000000e+00 : f32
    %13 = vector.broadcast %cst_7 : f32 to vector<16x64xf32>
    %14 = arith.addf %13, %12 : vector<16x64xf32>
    %15 = tpu.reciprocal %14 {approx = true} : vector<16x64xf32> -> vector<16x64xf32>
    %16 = arith.mulf %8, %15 : vector<16x64xf32>
    %17 = vector.extract_strided_slice %5 {offsets = [0, 128], sizes = [16, 256], strides = [1, 1]} : vector<16x384xf32> to vector<16x256xf32>
    %18 = arith.truncf %16 : vector<16x64xf32> to vector<16x64xbf16>
    %c0_8 = arith.constant 0 : index
    %c0_9 = arith.constant 0 : index
    %19 = vector.load %arg4[%c0_8, %c0_9] : memref<64x256xbf16, #tpu.memory_space<vmem>>, vector<64x256xbf16>
    %cst_10 = arith.constant dense<0.000000e+00> : vector<16x256xf32>
    %20 = tpu.matmul %18, %19, %cst_10 {dimension_numbers = #tpu.dot_dimension_numbers<[1], [0], [0], [1], [0, 0, 1, 1], [], []>} : vector<16x64xbf16>, vector<64x256xbf16>, vector<16x256xf32> -> vector<16x256xf32>
    %21 = arith.addf %17, %20 : vector<16x256xf32>
    %22 = vector.extract_strided_slice %21 {offsets = [0, 0], sizes = [16, 128], strides = [1, 1]} : vector<16x256xf32> to vector<16x128xf32>
    %cst_11 = arith.constant 0.000000e+00 : f32
    %23 = vector.broadcast %cst_11 : f32 to vector<16x128xf32>
    %24 = arith.maximumf %22, %23 : vector<16x128xf32>
    %25 = vector.extract_strided_slice %21 {offsets = [0, 128], sizes = [16, 128], strides = [1, 1]} : vector<16x256xf32> to vector<16x128xf32>
    %cst_12 = arith.constant 0.000000e+00 : f32
    %26 = vector.broadcast %cst_12 : f32 to vector<16x128xf32>
    %27 = arith.subf %26, %25 : vector<16x128xf32>
    %28 = math.exp %27 : vector<16x128xf32>
    %cst_13 = arith.constant 1.000000e+00 : f32
    %29 = vector.broadcast %cst_13 : f32 to vector<16x128xf32>
    %30 = arith.addf %29, %28 : vector<16x128xf32>
    %31 = tpu.reciprocal %30 {approx = true} : vector<16x128xf32> -> vector<16x128xf32>
    %32 = arith.mulf %24, %31 : vector<16x128xf32>
    %c0_14 = arith.constant 0 : index
    %c0_15 = arith.constant 0 : index
    %33 = vector.load %arg5[%c0_14, %c0_15] : memref<128x128xf32, #tpu.memory_space<vmem>>, vector<128x128xf32>
    %cst_16 = arith.constant dense<0.000000e+00> : vector<16x128xf32>
    %34 = tpu.matmul %32, %33, %cst_16 {dimension_numbers = #tpu.dot_dimension_numbers<[1], [0], [0], [1], [0, 0, 1, 1], [], []>} : vector<16x128xf32>, vector<128x128xf32>, vector<16x128xf32> -> vector<16x128xf32>
    %c0_17 = arith.constant 0 : index
    %c0_18 = arith.constant 0 : index
    %35 = vector.load %arg6[%c0_17, %c0_18] : memref<16x128xf32, #tpu.memory_space<vmem>>, vector<16x128xf32>
    tpu.vector_store %arg6[%c0_17, %c0_18], %34 {strides = array<i32>} : memref<16x128xf32, #tpu.memory_space<vmem>>, vector<16x128xf32>,
    return
  }
  func.func @transform_0(%arg0: i32) -> (i32, i32) {
    %c0_i32 = arith.constant 0 : i32
    %c0_i32_0 = arith.constant 0 : i32
    return %arg0, %c0_i32 : i32, i32
  }
  func.func @transform_1(%arg0: i32) -> (i32, i32) {
    %c0_i32 = arith.constant 0 : i32
    %c0_i32_0 = arith.constant 0 : i32
    %c0_i32_1 = arith.constant 0 : i32
    return %c0_i32, %c0_i32_0 : i32, i32
  }
  func.func @transform_2(%arg0: i32) -> (i32, i32) {
    %c0_i32 = arith.constant 0 : i32
    %c0_i32_0 = arith.constant 0 : i32
    %c0_i32_1 = arith.constant 0 : i32
    return %c0_i32, %c0_i32_0 : i32, i32
  }
  func.func @transform_3(%arg0: i32) -> (i32, i32) {
    %c0_i32 = arith.constant 0 : i32
    %c0_i32_0 = arith.constant 0 : i32
    %c0_i32_1 = arith.constant 0 : i32
    return %c0_i32, %c0_i32_0 : i32, i32
  }
  func.func @transform_4(%arg0: i32) -> (i32, i32) {
    %c0_i32 = arith.constant 0 : i32
    %c0_i32_0 = arith.constant 0 : i32
    %c0_i32_1 = arith.constant 0 : i32
    return %c0_i32, %c0_i32_0 : i32, i32
  }
  func.func @transform_5(%arg0: i32) -> (i32, i32) {
    %c0_i32 = arith.constant 0 : i32
    %c0_i32_0 = arith.constant 0 : i32
    return %arg0, %c0_i32 : i32, i32
  }
}

</mosaic_0001>

<llo_original>
// kernel: tpu_custom_call.1
$region0: #{tpu_custom_call.1}
  #allocation0 [shape = 'u32[]', space=smem, size = 0x4, offset = 0x4, fixed_abs, tag = 'smem constant byte address 0x4 - core index']
  #allocation1 [shape = 'u32[144,128]{1,0:T(1,128)}', space=vmem, size = 0x12000, scoped, tag = 'internal scratch']
  %s0 = inlined_call_operand.hbm [shape: bf16[16,16], index: 0, kind: input, shape index: {}]
  %s1 = inlined_call_operand.hbm [shape: bf16[16,384], index: 1, kind: input, shape index: {}]
  %s2 = inlined_call_operand.vmem [shape: f32[1,384], index: 2, kind: input, shape index: {}]
  %s3 = inlined_call_operand.hbm [shape: bf16[64,256], index: 3, kind: input, shape index: {}]
  %s4 = inlined_call_operand.hbm [shape: f32[128,128], index: 4, kind: input, shape index: {}]
  %s5 = inlined_call_operand.hbm [shape: f32[16,128], index: 5, kind: output, shape index: {}]
  %s6 = sld [smem:[#allocation0]]
  $region46: #{tpu_custom_call.1} parent=0
    _
  %s8 = ssub.s32 1, %s6
  %s9 = scalar_select 0, %s8, %s6
  $region1: #{tpu_custom_call.1} parent=0
    #allocation2 [shape = 'u8[4096]{0}', space=vmem, size = 0x1000, scoped, tag = 'input window, operand 0, single buffered']
    #allocation3 [shape = 's32[1]{0}', space=sflag, size = 0x4, scoped, tag = 'scoped memory for tpu_custom_call.1']
    #allocation4 [shape = 's32[1]{0}', space=sflag, size = 0x4, scoped, tag = 'scoped memory for tpu_custom_call.1']
    #allocation5 [shape = 'u8[12288]{0}', space=vmem, size = 0x3000, scoped, tag = 'input window, operand 1, single buffered']
    #allocation6 [shape = 's32[1]{0}', space=sflag, size = 0x4, scoped, tag = 'scoped memory for tpu_custom_call.1']
    #allocation7 [shape = 'u8[32768]{0}', space=vmem, size = 0x8000, scoped, tag = 'input window, operand 3, single buffered']
    #allocation8 [shape = 'u8[65536]{0}', space=vmem, size = 0x10000, scoped, tag = 'input window, operand 4, single buffered']
    #allocation9 [shape = 's32[1]{0}', space=sflag, size = 0x4, scoped, tag = 'scoped memory for tpu_custom_call.1']
    #allocation10 [shape = 'u8[8192]{0}', space=vmem, size = 0x2000, scoped, tag = 'output window, operand 0, single buffered']
    %10 = vsyncpa [#allocation3], 0
    %11 = vsyncpa [#allocation6], 0
    %12 = vsyncpa [#allocation9], 0
    %13 = vsyncpa [#allocation4], 0
    // Predicated region
    $region2: #{tpu_custom_call.1} parent=1 // pred_check
      _
    $region3: #{tpu_custom_call.1} parent=1 // pred_check_branch
      %15 = sbr.rel (0) target = $region5
    $region4: #{tpu_custom_call.1} parent=1 // pred_region
      %s17 = ssub.s32 128, 128
      %18 = vsyncadd [#allocation3], %s17
      %s19 = sshll.u32 [#allocation2], 4
      %s20 = int_to_ptr.vmem [resolvable:$true] %s19
      %25 = dma.hbm_to_vmem [thread:$0]  %s0, 128, %s20, [#allocation3], 64, 64, 4
    $region5: #{tpu_custom_call.1} parent=1 // pred_fallthru
      _
    // Predicated region
    $region6: #{tpu_custom_call.1} parent=1 // pred_check
      _
    $region7: #{tpu_custom_call.1} parent=1 // pred_check_branch
      %27 = sbr.rel (0) target = $region9
    $region8: #{tpu_custom_call.1} parent=1 // pred_region
      %s29 = ssub.s32 384, 384
      %30 = vsyncadd [#allocation6], %s29
      %s31 = sshll.u32 [#allocation5], 4
      %s32 = int_to_ptr.vmem [resolvable:$true] %s31
      %37 = dma.hbm_to_vmem [thread:$0]  %s1, 384, %s32, [#allocation6], 192, 192, 12
    $region9: #{tpu_custom_call.1} parent=1 // pred_fallthru
      _
    // Predicated region
    $region10: #{tpu_custom_call.1} parent=1 // pred_check
      _
    $region11: #{tpu_custom_call.1} parent=1 // pred_check_branch
      %39 = sbr.rel (0) target = $region13
    $region12: #{tpu_custom_call.1} parent=1 // pred_region
      _
    $region13: #{tpu_custom_call.1} parent=1 // pred_fallthru
      _
    // Predicated region
    $region14: #{tpu_custom_call.1} parent=1 // pred_check
      _
    $region15: #{tpu_custom_call.1} parent=1 // pred_check_branch
      %41 = sbr.rel (0) target = $region17
    $region16: #{tpu_custom_call.1} parent=1 // pred_region
      %s43 = ssub.s32 1024, 1024
      %44 = vsyncadd [#allocation6], %s43
      %s45 = sshll.u32 [#allocation7], 4
      %s46 = int_to_ptr.vmem [resolvable:$true] %s45
      %51 = dma.hbm_to_vmem [thread:$0]  %s3, 1024, %s46, [#allocation6], 128, 128, 8
    $region17: #{tpu_custom_call.1} parent=1 // pred_fallthru
      _
    // Predicated region
    $region18: #{tpu_custom_call.1} parent=1 // pred_check
      _
    $region19: #{tpu_custom_call.1} parent=1 // pred_check_branch
      %53 = sbr.rel (0) target = $region21
    $region20: #{tpu_custom_call.1} parent=1 // pred_region
      %s55 = ssub.s32 2048, 2048
      %56 = vsyncadd [#allocation9], %s55
      %s57 = sshll.u32 [#allocation8], 4
      %s58 = int_to_ptr.vmem [resolvable:$true] %s57
      %63 = dma.hbm_to_vmem [thread:$0]  %s4, 2048, %s58, [#allocation9], 128, 128, 8
    $region21: #{tpu_custom_call.1} parent=1 // pred_fallthru
      _
    // Predicated region
    $region22: #{tpu_custom_call.1} parent=1 // pred_check
      _
    $region23: #{tpu_custom_call.1} parent=1 // pred_check_branch
      %65 = sbr.rel (0) target = $region25
    $region24: #{tpu_custom_call.1} parent=1 // pred_region
      %66 = dma.done [#allocation3], 128
    $region25: #{tpu_custom_call.1} parent=1 // pred_fallthru
      _
    // Predicated region
    $region26: #{tpu_custom_call.1} parent=1 // pred_check
      _
    $region27: #{tpu_custom_call.1} parent=1 // pred_check_branch
      %68 = sbr.rel (0) target = $region29
    $region28: #{tpu_custom_call.1} parent=1 // pred_region
      %69 = dma.done [#allocation6], 384
    $region29: #{tpu_custom_call.1} parent=1 // pred_fallthru
      _
    // Predicated region
    $region30: #{tpu_custom_call.1} parent=1 // pred_check
      _
    $region31: #{tpu_custom_call.1} parent=1 // pred_check_branch
      %71 = sbr.rel (0) target = $region33
    $region32: #{tpu_custom_call.1} parent=1 // pred_region
      %72 = dma.done [#allocation6], 1024
    $region33: #{tpu_custom_call.1} parent=1 // pred_fallthru
      _
    // Predicated region
    $region34: #{tpu_custom_call.1} parent=1 // pred_check
      _
    $region35: #{tpu_custom_call.1} parent=1 // pred_check_branch
      %74 = sbr.rel (0) target = $region37
    $region36: #{tpu_custom_call.1} parent=1 // pred_region
      %75 = dma.done [#allocation9], 2048
    $region37: #{tpu_custom_call.1} parent=1 // pred_fallthru
      _
    %v77 = vld [vmem:[#allocation2] sm:$0xf]
    %v78 = vld [vmem:[#allocation2 + $0x4] sm:$0xf]
    %v79 = vld [vmem:[#allocation5] sm:$0xff]
    %v80 = vld [vmem:[#allocation5 + $0x8] sm:$0xf]
    %v81 = vld [vmem:[#allocation5 + $0xc] sm:$0xff]
    %v82 = vld [vmem:[#allocation5 + $0x14] sm:$0xf]
    %v83 = vld [vmem:[%s2] sm:$0x7]
    %v85 = vlaneseq
    %v86 = vshrl.u32 %v85, 7
    %v87 = vsub.s32 0, %v86
    %v88 = vrot.slane %v83, %v87
    %v89 = vlaneseq
    %v90 = vshrl.u32 %v89, 7
    %v91 = vsub.s32 1, %v90
    %v92 = vrot.slane %v83, %v91
    %v93 = vlaneseq
    %v94 = vshrl.u32 %v93, 7
    %v95 = vsub.s32 2, %v94
    %v96 = vrot.slane %v83, %v95
    %v102 = vunpack.c.l.b16 %v77
    %v103 = vunpack.c.l.b16 %v78
    %v104 = vpack.c.b16 %v103, %v102
    %v109 = vunpack.c.l.b16 %v79
    %v110 = vunpack.c.h.b16 %v79
    %v111 = vunpack.c.l.b16 %v80
    %v112 = vunpack.c.l.b16 %v81
    %v113 = vunpack.c.h.b16 %v81
    %v114 = vunpack.c.l.b16 %v82
    %v115 = vpack.c.b16 %v112, %v109
    %v116 = vpack.c.b16 %v113, %v110
    %v117 = vpack.c.b16 %v114, %v111
    %vm121 = vcmask 130048
    %v123 = vsel %vm121, %v104, 0
    %125 = vmatprep.subr.bf16.mxu0 %v116
    %126 = vmatpush1.bf16.msra.mxu0 %v115
    %127 = vmatprep.subr.bf16.mxu0 0
    %128 = vmatpush1.bf16.msra.mxu0 0
    %129 = vmatprep.subr.bf16.mxu0 0
    %130 = vmatpush1.bf16.msra.mxu0 0
    %131 = vmatprep.subr.bf16.mxu0 0
    %132 = vmatpush1.bf16.msra.mxu0 0
    %133 = vmatprep.subr.bf16.mxu0 0
    %134 = vmatpush1.bf16.msra.mxu0 0
    %135 = vmatprep.subr.bf16.mxu0 0
    %136 = vmatpush1.bf16.msra.mxu0 0
    %137 = vmatprep.subr.bf16.mxu0 0
    %138 = vmatpush1.bf16.msra.mxu0 0
    %139 = vmatprep.subr.bf16.mxu0 0
    %140 = vmatpush1.bf16.msra.mxu0 0
    %141 = vmatprep.subr.bf16.mxu0 0
    %142 = vmatpush1.bf16.msra.mxu0 0
    %143 = vmatprep.subr.bf16.mxu0 0
    %144 = vmatpush1.bf16.msra.mxu0 0
    %145 = vmatprep.subr.bf16.mxu0 0
    %146 = vmatpush1.bf16.msra.mxu0 0
    %147 = vmatprep.subr.bf16.mxu0 0
    %148 = vmatpush1.bf16.msra.mxu0 0
    %149 = vmatprep.subr.bf16.mxu0 0
    %150 = vmatpush1.bf16.msra.mxu0 0
    %151 = vmatprep.subr.bf16.mxu0 0
    %152 = vmatpush1.bf16.msra.mxu0 0
    %153 = vmatprep.subr.bf16.mxu0 0
    %154 = vmatpush1.bf16.msra.mxu0 0
    %155 = vmatprep.subr.bf16.mxu0 0
    %156 = vmatpush1.bf16.msra.mxu0 0
    %157 = vmatprep.mubr.bf16.mxu0 0
    %158 = vmatmul.mubr.bf16.gmra.mrb[0].mxu0 %v123
    %v159 = vpop.f32.mrb[0].mxu0
    %v160 = vadd.f32 %v88, %v159
    %v161 = vpop.f32.mrb[0].mxu0
    %v162 = vadd.f32 %v92, %v161
    %v163 = vpop.f32.mrb[0].mxu0
    %v164 = vadd.f32 %v88, %v163
    %v165 = vpop.f32.mrb[0].mxu0
    %v166 = vadd.f32 %v92, %v165
    %167 = vdwg.mxu0
    %168 = vmatprep.subr.bf16.mxu0 0
    %169 = vmatpush1.bf16.msra.mxu0 %v117
    %170 = vmatprep.subr.bf16.mxu0 0
    %171 = vmatpush1.bf16.msra.mxu0 0
    %172 = vmatprep.subr.bf16.mxu0 0
    %173 = vmatpush1.bf16.msra.mxu0 0
    %174 = vmatprep.subr.bf16.mxu0 0
    %175 = vmatpush1.bf16.msra.mxu0 0
    %176 = vmatprep.subr.bf16.mxu0 0
    %177 = vmatpush1.bf16.msra.mxu0 0
    %178 = vmatprep.subr.bf16.mxu0 0
    %179 = vmatpush1.bf16.msra.mxu0 0
    %180 = vmatprep.subr.bf16.mxu0 0
    %181 = vmatpush1.bf16.msra.mxu0 0
    %182 = vmatprep.subr.bf16.mxu0 0
    %183 = vmatpush1.bf16.msra.mxu0 0
    %184 = vmatprep.subr.bf16.mxu0 0
    %185 = vmatpush1.bf16.msra.mxu0 0
    %186 = vmatprep.subr.bf16.mxu0 0
    %187 = vmatpush1.bf16.msra.mxu0 0
    %188 = vmatprep.subr.bf16.mxu0 0
    %189 = vmatpush1.bf16.msra.mxu0 0
    %190 = vmatprep.subr.bf16.mxu0 0
    %191 = vmatpush1.bf16.msra.mxu0 0
    %192 = vmatprep.subr.bf16.mxu0 0
    %193 = vmatpush1.bf16.msra.mxu0 0
    %194 = vmatprep.subr.bf16.mxu0 0
    %195 = vmatpush1.bf16.msra.mxu0 0
    %196 = vmatprep.subr.bf16.mxu0 0
    %197 = vmatpush1.bf16.msra.mxu0 0
    %198 = vmatprep.subr.bf16.mxu0 0
    %199 = vmatpush1.bf16.msra.mxu0 0
    %200 = vmatprep.mubr.bf16.mxu0 0
    %201 = vmatmul.mubr.bf16.gmra.mrb[0].mxu0 %v123
    %v202 = vpop.f32.mrb[0].mxu0
    %v203 = vadd.f32 %v96, %v202
    %v204 = vpop.f32.mrb[0].mxu0
    %v205 = vpop.f32.mrb[0].mxu0
    %v206 = vadd.f32 %v96, %v205
    %v207 = vpop.f32.mrb[0].mxu0
    %208 = vdwg.mxu0
    %v209 = vmax.f32 %v160, 0.0
    %v210 = vmax.f32 %v164, 0.0
    %v211 = vsub.f32 0.0, %v160
    %v212 = vsub.f32 0.0, %v164
    %v213 = vmul.f32 %v211, 1.442695
    %v214 = vpow.pop %v213
    %v215 = vmul.f32 %v212, 1.442695
    %v216 = vpow.pop %v215
    %v217 = vadd.f32 %v214, 1.0
    %v218 = vadd.f32 %v216, 1.0
    %v219 = vrcp.pop %v217
    %v220 = vrcp.pop %v218
    %223 = vrot.lane.b32.xlu0 %v219, 64
    %v224 = vpop.permute.xlu0 %223
    %225 = vrot.lane.b32.xlu0 %v220, 64
    %v226 = vpop.permute.xlu0 %225
    %v229 = vmul.f32 %v209, %v224
    %v230 = vmul.f32 %v210, %v226
    %v231 = vpack.c.bf16 %v230, %v229
    %v232 = vld [vmem:[#allocation7] sm:$0xff]
    %v233 = vld [vmem:[#allocation7 + $0x8] sm:$0xff]
    %v234 = vld [vmem:[#allocation7 + $0x10] sm:$0xff]
    %v235 = vld [vmem:[#allocation7 + $0x18] sm:$0xff]
    %v236 = vld [vmem:[#allocation7 + $0x20] sm:$0xff]
    %v237 = vld [vmem:[#allocation7 + $0x28] sm:$0xff]
    %v238 = vld [vmem:[#allocation7 + $0x30] sm:$0xff]
    %v239 = vld [vmem:[#allocation7 + $0x38] sm:$0xff]
    %v248 = vunpack.c.l.b16 %v232
    %v249 = vunpack.c.h.b16 %v232
    %v250 = vunpack.c.l.b16 %v233
    %v251 = vunpack.c.h.b16 %v233
    %v252 = vunpack.c.l.b16 %v234
    %v253 = vunpack.c.h.b16 %v234
    %v254 = vunpack.c.l.b16 %v235
    %v255 = vunpack.c.h.b16 %v235
    %v256 = vunpack.c.l.b16 %v236
    %v257 = vunpack.c.h.b16 %v236
    %v258 = vunpack.c.l.b16 %v237
    %v259 = vunpack.c.h.b16 %v237
    %v260 = vunpack.c.l.b16 %v238
    %v261 = vunpack.c.h.b16 %v238
    %v262 = vunpack.c.l.b16 %v239
    %v263 = vunpack.c.h.b16 %v239
    %v264 = vpack.c.b16 %v250, %v248
    %v265 = vpack.c.b16 %v251, %v249
    %v266 = vpack.c.b16 %v254, %v252
    %v267 = vpack.c.b16 %v255, %v253
    %v268 = vpack.c.b16 %v258, %v256
    %v269 = vpack.c.b16 %v259, %v257
    %v270 = vpack.c.b16 %v262, %v260
    %v271 = vpack.c.b16 %v263, %v261
    %vm280 = vcmask 523264
    %v282 = vsel %vm280, %v231, 0
    %284 = vmatprep.subr.bf16.mxu0 %v265
    %285 = vmatpush1.bf16.msra.mxu0 %v264
    %286 = vmatprep.subr.bf16.mxu0 %v267
    %287 = vmatpush1.bf16.msra.mxu0 %v266
    %288 = vmatprep.subr.bf16.mxu0 %v269
    %289 = vmatpush1.bf16.msra.mxu0 %v268
    %290 = vmatprep.subr.bf16.mxu0 %v271
    %291 = vmatpush1.bf16.msra.mxu0 %v270
    %292 = vmatprep.subr.bf16.mxu0 0
    %293 = vmatpush1.bf16.msra.mxu0 0
    %294 = vmatprep.subr.bf16.mxu0 0
    %295 = vmatpush1.bf16.msra.mxu0 0
    %296 = vmatprep.subr.bf16.mxu0 0
    %297 = vmatpush1.bf16.msra.mxu0 0
    %298 = vmatprep.subr.bf16.mxu0 0
    %299 = vmatpush1.bf16.msra.mxu0 0
    %300 = vmatprep.subr.bf16.mxu0 0
    %301 = vmatpush1.bf16.msra.mxu0 0
    %302 = vmatprep.subr.bf16.mxu0 0
    %303 = vmatpush1.bf16.msra.mxu0 0
    %304 = vmatprep.subr.bf16.mxu0 0
    %305 = vmatpush1.bf16.msra.mxu0 0
    %306 = vmatprep.subr.bf16.mxu0 0
    %307 = vmatpush1.bf16.msra.mxu0 0
    %308 = vmatprep.subr.bf16.mxu0 0
    %309 = vmatpush1.bf16.msra.mxu0 0
    %310 = vmatprep.subr.bf16.mxu0 0
    %311 = vmatpush1.bf16.msra.mxu0 0
    %312 = vmatprep.subr.bf16.mxu0 0
    %313 = vmatpush1.bf16.msra.mxu0 0
    %314 = vmatprep.subr.bf16.mxu0 0
    %315 = vmatpush1.bf16.msra.mxu0 0
    %316 = vmatprep.mubr.bf16.mxu0 0
    %317 = vmatmul.mubr.bf16.gmra.mrb[0].mxu0 %v282
    %v318 = vpop.f32.mrb[0].mxu0
    %v319 = vadd.f32 0.0, %v318
    %v320 = vpop.f32.mrb[0].mxu0
    %v321 = vadd.f32 0.0, %v320
    %v322 = vpop.f32.mrb[0].mxu0
    %v323 = vadd.f32 0.0, %v322
    %v324 = vpop.f32.mrb[0].mxu0
    %v325 = vadd.f32 0.0, %v324
    %326 = vdwg.mxu0
    %v327 = vadd.f32 %v162, %v319
    %v328 = vadd.f32 %v203, %v321
    %v329 = vadd.f32 %v166, %v323
    %v330 = vadd.f32 %v206, %v325
    %v331 = vmax.f32 %v327, 0.0
    %v332 = vmax.f32 %v329, 0.0
    %v333 = vsub.f32 0.0, %v328
    %v334 = vsub.f32 0.0, %v330
    %v335 = vmul.f32 %v333, 1.442695
    %v336 = vpow.pop %v335
    %v337 = vmul.f32 %v334, 1.442695
    %v338 = vpow.pop %v337
    %v339 = vadd.f32 %v336, 1.0
    %v340 = vadd.f32 %v338, 1.0
    %v341 = vrcp.pop %v339
    %v342 = vrcp.pop %v340
    %v343 = vmul.f32 %v331, %v341
    %v344 = vmul.f32 %v332, %v342
    %v345 = vld [vmem:[#allocation8] sm:$0xff]
    %v346 = vld [vmem:[#allocation8 + $0x8] sm:$0xff]
    %v347 = vld [vmem:[#allocation8 + $0x10] sm:$0xff]
    %v348 = vld [vmem:[#allocation8 + $0x18] sm:$0xff]
    %v349 = vld [vmem:[#allocation8 + $0x20] sm:$0xff]
    %v350 = vld [vmem:[#allocation8 + $0x28] sm:$0xff]
    %v351 = vld [vmem:[#allocation8 + $0x30] sm:$0xff]
    %v352 = vld [vmem:[#allocation8 + $0x38] sm:$0xff]
    %v353 = vld [vmem:[#allocation8 + $0x40] sm:$0xff]
    %v354 = vld [vmem:[#allocation8 + $0x48] sm:$0xff]
    %v355 = vld [vmem:[#allocation8 + $0x50] sm:$0xff]
    %v356 = vld [vmem:[#allocation8 + $0x58] sm:$0xff]
    %v357 = vld [vmem:[#allocation8 + $0x60] sm:$0xff]
    %v358 = vld [vmem:[#allocation8 + $0x68] sm:$0xff]
    %v359 = vld [vmem:[#allocation8 + $0x70] sm:$0xff]
    %v360 = vld [vmem:[#allocation8 + $0x78] sm:$0xff]
    %361 = vmatprep.subr.mxu0 0.0
    %362 = vmatpush1.msra.mxu0 %v345
    %363 = vmatprep.subr.mxu0 0.0
    %364 = vmatpush1.msra.mxu0 %v346
    %365 = vmatprep.subr.mxu0 0.0
    %366 = vmatpush1.msra.mxu0 %v347
    %367 = vmatprep.subr.mxu0 0.0
    %368 = vmatpush1.msra.mxu0 %v348
    %369 = vmatprep.subr.mxu0 0.0
    %370 = vmatpush1.msra.mxu0 %v349
    %371 = vmatprep.subr.mxu0 0.0
    %372 = vmatpush1.msra.mxu0 %v350
    %373 = vmatprep.subr.mxu0 0.0
    %374 = vmatpush1.msra.mxu0 %v351
    %375 = vmatprep.subr.mxu0 0.0
    %376 = vmatpush1.msra.mxu0 %v352
    %377 = vmatprep.subr.mxu0 0.0
    %378 = vmatpush1.msra.mxu0 %v353
    %379 = vmatprep.subr.mxu0 0.0
    %380 = vmatpush1.msra.mxu0 %v354
    %381 = vmatprep.subr.mxu0 0.0
    %382 = vmatpush1.msra.mxu0 %v355
    %383 = vmatprep.subr.mxu0 0.0
    %384 = vmatpush1.msra.mxu0 %v356
    %385 = vmatprep.subr.mxu0 0.0
    %386 = vmatpush1.msra.mxu0 %v357
    %387 = vmatprep.subr.mxu0 0.0
    %388 = vmatpush1.msra.mxu0 %v358
    %389 = vmatprep.subr.mxu0 0.0
    %390 = vmatpush1.msra.mxu0 %v359
    %391 = vmatprep.subr.mxu0 0.0
    %392 = vmatpush1.msra.mxu0 %v360
    %393 = vmatprep.subr.mxu0 0.0
    %394 = vmatpush1.msra.mxu0 0.0
    %395 = vmatprep.subr.mxu0 0.0
    %396 = vmatpush1.msra.mxu0 0.0
    %397 = vmatprep.subr.mxu0 0.0
    %398 = vmatpush1.msra.mxu0 0.0
    %399 = vmatprep.subr.mxu0 0.0
    %400 = vmatpush1.msra.mxu0 0.0
    %401 = vmatprep.subr.mxu0 0.0
    %402 = vmatpush1.msra.mxu0 0.0
    %403 = vmatprep.subr.mxu0 0.0
    %404 = vmatpush1.msra.mxu0 0.0
    %405 = vmatprep.subr.mxu0 0.0
    %406 = vmatpush1.msra.mxu0 0.0
    %407 = vmatprep.subr.mxu0 0.0
    %408 = vmatpush1.msra.mxu0 0.0
    %409 = vmatprep.subr.mxu0 0.0
    %410 = vmatpush1.msra.mxu0 0.0
    %411 = vmatprep.subr.mxu0 0.0
    %412 = vmatpush1.msra.mxu0 0.0
    %413 = vmatprep.subr.mxu0 0.0
    %414 = vmatpush1.msra.mxu0 0.0
    %415 = vmatprep.subr.mxu0 0.0
    %416 = vmatpush1.msra.mxu0 0.0
    %417 = vmatprep.subr.mxu0 0.0
    %418 = vmatpush1.msra.mxu0 0.0
    %419 = vmatprep.subr.mxu0 0.0
    %420 = vmatpush1.msra.mxu0 0.0
    %421 = vmatprep.subr.mxu0 0.0
    %422 = vmatpush1.msra.mxu0 0.0
    %423 = vmatprep.subr.mxu0 0.0
    %424 = vmatpush1.msra.mxu0 0.0
    %425 = vmatprep.mubr.f32.mxu0 0.0
    %426 = vmatmul.mubr.f32.gmra.mrb[0].mxu0 %v343
    %v427 = vpop.f32.mrb[0].mxu0
    %v428 = vadd.f32 0.0, %v427
    %v429 = vpop.f32.mrb[0].mxu0
    %430 = vmatprep.mubr.f32.mxu0 0.0
    %431 = vmatmul.mubr.f32.gmra.mrb[0].mxu0 %v344
    %v432 = vpop.f32.mrb[0].mxu0
    %v433 = vadd.f32 0.0, %v432
    %v434 = vpop.f32.mrb[0].mxu0
    %435 = vdwg.mxu0
    %436 = vst [vmem:[#allocation10] sm:$0xff] %v428
    %437 = vst [vmem:[#allocation10 + $0x8] sm:$0xff] %v433
    // Predicated region
    $region38: #{tpu_custom_call.1} parent=1 // pred_check
      _
    $region39: #{tpu_custom_call.1} parent=1 // pred_check_branch
      %439 = sbr.rel (0) target = $region41
    $region40: #{tpu_custom_call.1} parent=1 // pred_region
      %s441 = ssub.s32 256, 256
      %442 = vsyncadd [#allocation4], %s441
      %s443 = sshll.u32 [#allocation10], 4
      %s444 = int_to_ptr.vmem [resolvable:$true] %s443
      %449 = dma.vmem_to_hbm [thread:$0]  %s444, 256, %s5, [#allocation4], 128, 128, 8
    $region41: #{tpu_custom_call.1} parent=1 // pred_fallthru
      _
    // Predicated region
    $region42: #{tpu_custom_call.1} parent=1 // pred_check
      _
    $region43: #{tpu_custom_call.1} parent=1 // pred_check_branch
      %451 = sbr.rel (0) target = $region45
    $region44: #{tpu_custom_call.1} parent=1 // pred_region
      %452 = dma.done [#allocation4], 256
    $region45: #{tpu_custom_call.1} parent=1 // pred_fallthru
      _
    %453 = vsyncpa [#allocation3], 1
    %454 = vsyncpa [#allocation6], 1
    %455 = vsyncpa [#allocation9], 1
    %456 = vsyncpa [#allocation4], 1

</llo_original>
